<compile_context>
chip_gen: v5e
topology: v5e:2x2
jax: 0.10.0
libtpu: 0.0.40
codegen_flags: <defaults>
</compile_context>

<pallas_src>
import jax
import jax.numpy as jnp
from jax.experimental import pallas as pl
from jax.experimental.pallas import tpu as pltpu

EPS = 1e-5
LANE = 128


# ---------------------------------------------------------------------------
# helpers
# ---------------------------------------------------------------------------
def _round_up(x, m):
    return ((x + m - 1) // m) * m


def _pad2d(a, rows, cols):
    return jnp.pad(a, ((0, rows - a.shape[0]), (0, cols - a.shape[1])))


def _choose_tiles(np_):
    """Largest power-of-two tiles dividing the padded node count."""
    def pick(cands):
        for t in cands:
            if np_ % t == 0:
                return t
        return LANE

    tm = pick((512, 256, 128))
    # keep >= 4 row tiles when possible so v7x's two TensorCores stay balanced
    while tm > LANE and np_ // tm < 4:
        tm //= 2
    tk = pick((2048, 1024, 512, 256, 128))
    return tm, tk


def _vmem_estimate(np_, tm, tk, fin, fout, out_dim, out_bytes, has_head):
    """Honest per-layer working-set estimate in bytes."""
    bf, f32 = 2, 4
    b = 2 * tm * tk * bf                 # A tile (double-buffered HBM stream)
    b += 2 * np_ * fin * bf              # resident x (double-buffered by default)
    b += 2 * tm * LANE * f32             # inv_deg tile (lanes pad to 128)
    b += 2 * 2 * fin * fout * bf         # Wl, Wr
    b += 2 * 8 * fout * f32              # bias (sublanes pad to 8)
    b += 2 * tm * out_dim * out_bytes    # output tile
    if has_head:
        b += 2 * (fout * out_dim * bf + 8 * out_dim * f32)
    b += tm * fin * f32                  # f32 accumulator scratch
    return b


# ---------------------------------------------------------------------------
# kernels
# ---------------------------------------------------------------------------
def sage_layer_kernel(a_ref, x_ref, inv_ref, wl_ref, wr_ref, b_ref,
                      out_ref, acc_ref):
    """One SAGEConv (+ folded BN) + ReLU, tiled over (row tiles, K tiles)."""
    i = pl.program_id(0)
    k = pl.program_id(1)
    tm, tk = a_ref.shape

    @pl.when(k == 0)
    def _():
        acc_ref[...] = jnp.zeros_like(acc_ref)

    # aggregation partial sum on the raw edge-count adjacency:
    #   acc += A[i-tile, k-tile] @ x[k-tile]   (x is VMEM-resident, sliced here)
    xk = x_ref[pl.ds(pl.multiple_of(k * tk, tk), tk), :]
    acc_ref[...] += jnp.dot(a_ref[...], xk, preferred_element_type=jnp.float32)

    @pl.when(k == pl.num_programs(1) - 1)
    def _():
        # exact mean: per-row 1/deg applied in f32 here (not baked into bf16 A)
        agg = (acc_ref[...] * inv_ref[...]).astype(jnp.bfloat16)
        xi = x_ref[pl.ds(pl.multiple_of(i * tm, tm), tm), :]
        h = jnp.dot(agg, wl_ref[...], preferred_element_type=jnp.float32)
        h = h + jnp.dot(xi, wr_ref[...], preferred_element_type=jnp.float32)
        h = h + b_ref[...]                               # BN folded into w/b
        # NOTE: zero-padded rows store ReLU(bias) garbage; A's padded columns
        # are zero and the wrapper slices padded rows off, so this never feeds
        # back into real nodes.
        out_ref[...] = jnp.maximum(h, 0.0).astype(out_ref.dtype)


def sage_head_kernel(a_ref, x_ref, inv_ref, wl_ref, wr_ref, b_ref,
                     wo_ref, bo_ref, out_ref, acc_ref):
    """Layer 3 (SAGEConv + folded BN + ReLU) with the output Linear fused."""
    i = pl.program_id(0)
    k = pl.program_id(1)
    tm, tk = a_ref.shape

    @pl.when(k == 0)
    def _():
        acc_ref[...] = jnp.zeros_like(acc_ref)

    xk = x_ref[pl.ds(pl.multiple_of(k * tk, tk), tk), :]
    acc_ref[...] += jnp.dot(a_ref[...], xk, preferred_element_type=jnp.float32)

    @pl.when(k == pl.num_programs(1) - 1)
    def _():
        agg = (acc_ref[...] * inv_ref[...]).astype(jnp.bfloat16)
        xi = x_ref[pl.ds(pl.multiple_of(i * tm, tm), tm), :]
        h = jnp.dot(agg, wl_ref[...], preferred_element_type=jnp.float32)
        h = h + jnp.dot(xi, wr_ref[...], preferred_element_type=jnp.float32)
        h = jnp.maximum(h + b_ref[...], 0.0)
        out = jnp.dot(h.astype(jnp.bfloat16), wo_ref[...],
                      preferred_element_type=jnp.float32) + bo_ref[...]
        out_ref[...] = out.astype(out_ref.dtype)


# ---------------------------------------------------------------------------
# wrapper around one pallas_call (one SAGE layer, optionally with the head)
# ---------------------------------------------------------------------------
def _sage_layer_call(a, inv_deg, x, wl, wr, b, *, head=None,
                     out_dtype=jnp.bfloat16):
    np_, fin = x.shape
    fout = wl.shape[1]
    tm, tk = _choose_tiles(np_)
    grid = (np_ // tm, np_ // tk)

    in_specs = [
        pl.BlockSpec((tm, tk), lambda i, k: (i, k)),        # A tile (HBM stream)
        pl.BlockSpec((np_, fin), lambda i, k: (0, 0)),      # x, fully VMEM-resident
        pl.BlockSpec((tm, 1), lambda i, k: (i, 0)),         # per-row 1/deg (f32)
        pl.BlockSpec((fin, fout), lambda i, k: (0, 0)),     # Wl (BN folded)
        pl.BlockSpec((fin, fout), lambda i, k: (0, 0)),     # Wr (BN folded)
        pl.BlockSpec((1, fout), lambda i, k: (0, 0)),       # bias (BN folded)
    ]
    args = [a, x, inv_deg, wl, wr, b]

    if head is None:
        kernel = sage_layer_kernel
        out_dim = fout
    else:
        wo, bo = head
        out_dim = wo.shape[1]
        in_specs += [
            pl.BlockSpec((fout, out_dim), lambda i, k: (0, 0)),
            pl.BlockSpec((1, out_dim), lambda i, k: (0, 0)),
        ]
        args += [wo, bo]
        kernel = sage_head_kernel

    out_bytes = jnp.dtype(out_dtype).itemsize
    est = _vmem_estimate(np_, tm, tk, fin, fout, out_dim, out_bytes,
                         head is not None)
    vmem_limit = int(min(max(2 * est, 8 * 1024 * 1024), 48 * 1024 * 1024))

    flops = 2 * np_ * np_ * fin + 2 * 2 * np_ * fin * fout
    bytes_accessed = (np_ * np_ * 2 + np_ * fin * 2 + np_ * 4
                      + 2 * fin * fout * 2 + fout * 4 + np_ * out_dim * out_bytes)
    if head is not None:
        flops += 2 * np_ * fout * out_dim
        bytes_accessed += fout * out_dim * 2 + out_dim * 4

    return pl.pallas_call(
        kernel,
        out_shape=jax.ShapeDtypeStruct((np_, out_dim), out_dtype),
        grid_spec=pltpu.PrefetchScalarGridSpec(
            num_scalar_prefetch=0,
            grid=grid,
            in_specs=in_specs,
            out_specs=pl.BlockSpec((tm, out_dim), lambda i, k: (i, 0)),
            scratch_shapes=[pltpu.VMEM((tm, fin), jnp.float32)],
        ),
        compiler_params=pltpu.CompilerParams(
            dimension_semantics=("parallel", "arbitrary"),
            vmem_limit_bytes=vmem_limit,
        ),
        cost_estimate=pl.CostEstimate(
            flops=int(flops), transcendentals=0,
            bytes_accessed=int(bytes_accessed)),
    )(*args)


# ---------------------------------------------------------------------------
# parameter preparation: fold BN, pad to lanes, cast to bf16
# ---------------------------------------------------------------------------
def _fold_bn(wl, bl, wr, gamma, beta, mean, var):
    scale = gamma * jax.lax.rsqrt(var + EPS)          # (1, Fout)
    return wl * scale, wr * scale, (bl - mean) * scale + beta


def _prep_layer(wl, bl, wr, gamma, beta, mean, var, fin_p, fout_p):
    wl_f, wr_f, b_f = _fold_bn(wl, bl, wr, gamma, beta, mean, var)
    wl_p = _pad2d(wl_f, fin_p, fout_p).astype(jnp.bfloat16)
    wr_p = _pad2d(wr_f, fin_p, fout_p).astype(jnp.bfloat16)
    b_p = _pad2d(b_f, 1, fout_p).astype(jnp.float32)
    return wl_p, wr_p, b_p


def prepare_params(params, input_dim, hidden_dim, output_dim, num_classes):
    fin_p = _round_up(input_dim, LANE)
    fh_p = _round_up(hidden_dim, LANE)
    fo_p = _round_up(output_dim, LANE)
    c_p = _round_up(num_classes, LANE)

    w1l, w1r, b1 = _prep_layer(params["w1l"], params["b1l"], params["w1r"],
                               params["g1"], params["be1"], params["m1"],
                               params["v1"], fin_p, fh_p)
    w2l, w2r, b2 = _prep_layer(params["w2l"], params["b2l"], params["w2r"],
                               params["g2"], params["be2"], params["m2"],
                               params["v2"], fh_p, fh_p)
    w3l, w3r, b3 = _prep_layer(params["w3l"], params["b3l"], params["w3r"],
                               params["g3"], params["be3"], params["m3"],
                               params["v3"], fh_p, fo_p)
    wout = _pad2d(params["wout"], fo_p, c_p).astype(jnp.bfloat16)
    bout = _pad2d(params["bout"], 1, c_p).astype(jnp.float32)
    return dict(w1l=w1l, w1r=w1r, b1=b1, w2l=w2l, w2r=w2r, b2=b2,
                w3l=w3l, w3r=w3r, b3=b3, wout=wout, bout=bout,
                fin_p=fin_p, num_classes=num_classes)


# ---------------------------------------------------------------------------
# full forward
# ---------------------------------------------------------------------------
def sageids_forward(x, adj_counts, inv_deg, prepped):
    """x: [N, input_dim] f32; adj_counts: [N, N] edge counts; inv_deg: [N, 1]."""
    n = x.shape[0]
    np_ = _round_up(max(n, LANE), LANE)

    xp = _pad2d(x, np_, prepped["fin_p"]).astype(jnp.bfloat16)
    # small-integer edge counts are exactly representable in bf16
    ap = _pad2d(adj_counts, np_, np_).astype(jnp.bfloat16)
    invp = _pad2d(inv_deg, np_, 1).astype(jnp.float32)

    h = _sage_layer_call(ap, invp, xp, prepped["w1l"], prepped["w1r"],
                         prepped["b1"], out_dtype=jnp.bfloat16)
    h = _sage_layer_call(ap, invp, h, prepped["w2l"], prepped["w2r"],
                         prepped["b2"], out_dtype=jnp.bfloat16)
    out = _sage_layer_call(ap, invp, h, prepped["w3l"], prepped["w3r"],
                           prepped["b3"],
                           head=(prepped["wout"], prepped["bout"]),
                           out_dtype=jnp.float32)
    return out[:n, :prepped["num_classes"]]


# ---------------------------------------------------------------------------
# graph / parameter construction and pure-JAX reference
# ---------------------------------------------------------------------------
def build_graph_operators(edge_index, num_nodes):
    """Dense edge-count adjacency (A[i, j] = #edges j->i) and per-row 1/deg."""
    src, dst = edge_index[0], edge_index[1]
    adj = jnp.zeros((num_nodes, num_nodes), jnp.float32)
    adj = adj.at[dst, src].add(1.0)
    deg = adj.sum(axis=1, keepdims=True)
    inv_deg = 1.0 / jnp.maximum(deg, 1.0)   # isolated nodes aggregate to 0 (PyG)
    return adj, inv_deg


def init_params(key, input_dim, hidden_dim, output_dim, num_classes):
    ks = jax.random.split(key, 16)

    def lin(k, fan_in, fan_out):
        lim = 1.0 / jnp.sqrt(fan_in)
        return jax.random.uniform(k, (fan_in, fan_out), jnp.float32, -lim, lim)

    def bias(k, fan_in, fan_out):
        lim = 1.0 / jnp.sqrt(fan_in)
        return jax.random.uniform(k, (1, fan_out), jnp.float32, -lim, lim)

    def bn(dim):
        return (jnp.ones((1, dim), jnp.float32), jnp.zeros((1, dim), jnp.float32),
                jnp.zeros((1, dim), jnp.float32), jnp.ones((1, dim), jnp.float32))

    g1, be1, m1, v1 = bn(hidden_dim)
    g2, be2, m2, v2 = bn(hidden_dim)
    g3, be3, m3, v3 = bn(output_dim)

    return dict(
        w1l=lin(ks[0], input_dim, hidden_dim), b1l=bias(ks[1], input_dim, hidden_dim),
        w1r=lin(ks[2], input_dim, hidden_dim), g1=g1, be1=be1, m1=m1, v1=v1,
        w2l=lin(ks[3], hidden_dim, hidden_dim), b2l=bias(ks[4], hidden_dim, hidden_dim),
        w2r=lin(ks[5], hidden_dim, hidden_dim), g2=g2, be2=be2, m2=m2, v2=v2,
        w3l=lin(ks[6], hidden_dim, output_dim), b3l=bias(ks[7], hidden_dim, output_dim),
        w3r=lin(ks[8], hidden_dim, output_dim), g3=g3, be3=be3, m3=m3, v3=v3,
        wout=lin(ks[9], output_dim, num_classes), bout=bias(ks[10], output_dim, num_classes),
    )


def sageids_reference(x, a_mean, params):
    """Pure-JAX f32 reference with the original (unfolded) parameters."""
    def layer(h, wl, bl, wr, g, be, m, v):
        agg = a_mean @ h
        z = agg @ wl + bl + h @ wr
        z = (z - m) * (g * jax.lax.rsqrt(v + EPS)) + be
        return jnp.maximum(z, 0.0)

    h = layer(x, params["w1l"], params["b1l"], params["w1r"],
              params["g1"], params["be1"], params["m1"], params["v1"])
    h = layer(h, params["w2l"], params["b2l"], params["w2r"],
              params["g2"], params["be2"], params["m2"], params["v2"])
    h = layer(h, params["w3l"], params["b3l"], params["w3r"],
              params["g3"], params["be3"], params["m3"], params["v3"])
    return h @ params["wout"] + params["bout"]


if __name__ == "__main__":
    key = jax.random.PRNGKey(0)
    k_x, k_e, k_p = jax.random.split(key, 3)

    num_nodes, input_dim, hidden_dim, output_dim, num_classes = 16, 8, 32, 16, 4
    num_edges = 48

    x = jax.random.normal(k_x, (num_nodes, input_dim), jnp.float32)
    edge_index = jax.random.randint(k_e, (2, num_edges), 0, num_nodes)
    adj_counts, inv_deg = build_graph_operators(edge_index, num_nodes)

    params = init_params(k_p, input_dim, hidden_dim, output_dim, num_classes)
    prepped = prepare_params(params, input_dim, hidden_dim, output_dim, num_classes)

    out = sageids_forward(x, adj_counts, inv_deg, prepped)
    out = jax.block_until_ready(out)
    assert out.shape == (num_nodes, num_classes)

    a_mean = adj_counts * inv_deg
    ref = sageids_reference(x, a_mean, params)
    err = float(jnp.max(jnp.abs(out - ref)))
    assert err < 5e-2, f"max abs error vs reference: {err}"

    print("KERNEL_OK")
</pallas_src>

<mosaic_0001>
module attributes {stable_mosaic.version = 11 : i64} {
  func.func @sage_layer_kernel(%arg0: i32, %arg1: i32, %arg2: memref<128x128xbf16, #tpu.memory_space<vmem>>, %arg3: memref<128x128xbf16, #tpu.memory_space<vmem>>, %arg4: memref<128x1xf32, #tpu.memory_space<vmem>>, %arg5: memref<128x128xbf16, #tpu.memory_space<vmem>>, %arg6: memref<128x128xbf16, #tpu.memory_space<vmem>>, %arg7: memref<1x128xf32, #tpu.memory_space<vmem>>, %arg8: memref<128x128xbf16, #tpu.memory_space<vmem>>, %arg9: memref<128x128xf32, #tpu.memory_space<vmem>>) attributes {dimension_semantics = [#tpu.dimension_semantics<parallel>, #tpu.dimension_semantics<arbitrary>], iteration_bounds = array<i64: 1, 1>, scalar_prefetch = 0 : i64, scratch_operands = 1 : i64, tpu.core_type = #tpu.core_type<tc>, window_params = [{transform_indices = @transform_0, window_bounds = array<i64: 128, 128>}, {pipeline_mode = #tpu.pipeline_mode<synchronous>, transform_indices = @transform_1, window_bounds = array<i64: 128, 128>}, {transform_indices = @transform_2, window_bounds = array<i64: 128, 1>}, {pipeline_mode = #tpu.pipeline_mode<synchronous>, transform_indices = @transform_3, window_bounds = array<i64: 128, 128>}, {pipeline_mode = #tpu.pipeline_mode<synchronous>, transform_indices = @transform_4, window_bounds = array<i64: 128, 128>}, {pipeline_mode = #tpu.pipeline_mode<synchronous>, transform_indices = @transform_5, window_bounds = array<i64: 1, 128>}, {transform_indices = @transform_6, window_bounds = array<i64: 128, 128>}]} {
    %c0_i32 = arith.constant 0 : i32
    %0 = arith.cmpi eq, %arg1, %c0_i32 : i32
    %1 = arith.extui %0 : i1 to i32
    %c0_i32_0 = arith.constant 0 : i32
    %2 = arith.cmpi ne, %1, %c0_i32_0 : i32
    scf.if %2 {
      %cst_9 = arith.constant 0.000000e+00 : f32
      %15 = vector.broadcast %cst_9 : f32 to vector<128x128xf32>
      %c0_10 = arith.constant 0 : index
      %c0_11 = arith.constant 0 : index
      %16 = vector.load %arg9[%c0_10, %c0_11] : memref<128x128xf32, #tpu.memory_space<vmem>>, vector<128x128xf32>
      tpu.vector_store %arg9[%c0_10, %c0_11], %15 {strides = array<i32>} : memref<128x128xf32, #tpu.memory_space<vmem>>, vector<128x128xf32>,
    } else {
    }
    %c128_i32 = arith.constant 128 : i32
    %3 = arith.muli %arg1, %c128_i32 : i32
    %4 = tpu.assume_multiple %3, 128 : i32
    %5 = arith.index_cast %4 : i32 to index
    %c0 = arith.constant 0 : index
    %6 = vector.load %arg3[%5, %c0] : memref<128x128xbf16, #tpu.memory_space<vmem>>, vector<128x128xbf16>
    %c0_1 = arith.constant 0 : index
    %c0_2 = arith.constant 0 : index
    %7 = vector.load %arg9[%c0_1, %c0_2] : memref<128x128xf32, #tpu.memory_space<vmem>>, vector<128x128xf32>
    %c0_3 = arith.constant 0 : index
    %c0_4 = arith.constant 0 : index
    %8 = vector.load %arg2[%c0_3, %c0_4] : memref<128x128xbf16, #tpu.memory_space<vmem>>, vector<128x128xbf16>
    %cst = arith.constant dense<0.000000e+00> : vector<128x128xf32>
    %9 = tpu.matmul %8, %6, %cst {dimension_numbers = #tpu.dot_dimension_numbers<[1], [0], [0], [1], [0, 0, 1, 1], [], []>} : vector<128x128xbf16>, vector<128x128xbf16>, vector<128x128xf32> -> vector<128x128xf32>
    %10 = arith.addf %7, %9 : vector<128x128xf32>
    %c0_5 = arith.constant 0 : index
    %c0_6 = arith.constant 0 : index
    %11 = vector.load %arg9[%c0_5, %c0_6] : memref<128x128xf32, #tpu.memory_space<vmem>>, vector<128x128xf32>
    tpu.vector_store %arg9[%c0_5, %c0_6], %10 {strides = array<i32>} : memref<128x128xf32, #tpu.memory_space<vmem>>, vector<128x128xf32>,
    %c0_i32_7 = arith.constant 0 : i32
    %12 = arith.cmpi eq, %arg1, %c0_i32_7 : i32
    %13 = arith.extui %12 : i1 to i32
    %c0_i32_8 = arith.constant 0 : i32
    %14 = arith.cmpi ne, %13, %c0_i32_8 : i32
    scf.if %14 {
      %c0_9 = arith.constant 0 : index
      %c0_10 = arith.constant 0 : index
      %15 = vector.load %arg9[%c0_9, %c0_10] : memref<128x128xf32, #tpu.memory_space<vmem>>, vector<128x128xf32>
      %c0_11 = arith.constant 0 : index
      %c0_12 = arith.constant 0 : index
      %16 = vector.load %arg4[%c0_11, %c0_12] : memref<128x1xf32, #tpu.memory_space<vmem>>, vector<128x1xf32>
      %17 = vector.broadcast %16 : vector<128x1xf32> to vector<128x128xf32>
      %18 = arith.mulf %15, %17 : vector<128x128xf32>
      %19 = arith.truncf %18 : vector<128x128xf32> to vector<128x128xbf16>
      %c128_i32_13 = arith.constant 128 : i32
      %20 = arith.muli %arg0, %c128_i32_13 : i32
      %21 = tpu.assume_multiple %20, 128 : i32
      %22 = arith.index_cast %21 : i32 to index
      %c0_14 = arith.constant 0 : index
      %23 = vector.load %arg3[%22, %c0_14] : memref<128x128xbf16, #tpu.memory_space<vmem>>, vector<128x128xbf16>
      %c0_15 = arith.constant 0 : index
      %c0_16 = arith.constant 0 : index
      %24 = vector.load %arg5[%c0_15, %c0_16] : memref<128x128xbf16, #tpu.memory_space<vmem>>, vector<128x128xbf16>
      %cst_17 = arith.constant dense<0.000000e+00> : vector<128x128xf32>
      %25 = tpu.matmul %19, %24, %cst_17 {dimension_numbers = #tpu.dot_dimension_numbers<[1], [0], [0], [1], [0, 0, 1, 1], [], []>} : vector<128x128xbf16>, vector<128x128xbf16>, vector<128x128xf32> -> vector<128x128xf32>
      %c0_18 = arith.constant 0 : index
      %c0_19 = arith.constant 0 : index
      %26 = vector.load %arg6[%c0_18, %c0_19] : memref<128x128xbf16, #tpu.memory_space<vmem>>, vector<128x128xbf16>
      %cst_20 = arith.constant dense<0.000000e+00> : vector<128x128xf32>
      %27 = tpu.matmul %23, %26, %cst_20 {dimension_numbers = #tpu.dot_dimension_numbers<[1], [0], [0], [1], [0, 0, 1, 1], [], []>} : vector<128x128xbf16>, vector<128x128xbf16>, vector<128x128xf32> -> vector<128x128xf32>
      %28 = arith.addf %25, %27 : vector<128x128xf32>
      %c0_21 = arith.constant 0 : index
      %c0_22 = arith.constant 0 : index
      %29 = vector.load %arg7[%c0_21, %c0_22] : memref<1x128xf32, #tpu.memory_space<vmem>>, vector<1x128xf32>
      %30 = vector.broadcast %29 : vector<1x128xf32> to vector<128x128xf32>
      %31 = arith.addf %28, %30 : vector<128x128xf32>
      %cst_23 = arith.constant 0.000000e+00 : f32
      %32 = vector.broadcast %cst_23 : f32 to vector<128x128xf32>
      %33 = arith.maximumf %31, %32 : vector<128x128xf32>
      %34 = arith.truncf %33 : vector<128x128xf32> to vector<128x128xbf16>
      %c0_24 = arith.constant 0 : index
      %c0_25 = arith.constant 0 : index
      %35 = vector.load %arg8[%c0_24, %c0_25] : memref<128x128xbf16, #tpu.memory_space<vmem>>, vector<128x128xbf16>
      tpu.vector_store %arg8[%c0_24, %c0_25], %34 {strides = array<i32>} : memref<128x128xbf16, #tpu.memory_space<vmem>>, vector<128x128xbf16>,
    } else {
    }
    return
  }
  func.func @transform_0(%arg0: i32, %arg1: i32) -> (i32, i32) {
    %c0_i32 = arith.constant 0 : i32
    return %arg0, %arg1 : i32, i32
  }
  func.func @transform_1(%arg0: i32, %arg1: i32) -> (i32, i32) {
    %c0_i32 = arith.constant 0 : i32
    %c0_i32_0 = arith.constant 0 : i32
    %c0_i32_1 = arith.constant 0 : i32
    return %c0_i32, %c0_i32_0 : i32, i32
  }
  func.func @transform_2(%arg0: i32, %arg1: i32) -> (i32, i32) {
    %c0_i32 = arith.constant 0 : i32
    %c0_i32_0 = arith.constant 0 : i32
    return %arg0, %c0_i32 : i32, i32
  }
  func.func @transform_3(%arg0: i32, %arg1: i32) -> (i32, i32) {
    %c0_i32 = arith.constant 0 : i32
    %c0_i32_0 = arith.constant 0 : i32
    %c0_i32_1 = arith.constant 0 : i32
    return %c0_i32, %c0_i32_0 : i32, i32
  }
  func.func @transform_4(%arg0: i32, %arg1: i32) -> (i32, i32) {
    %c0_i32 = arith.constant 0 : i32
    %c0_i32_0 = arith.constant 0 : i32
    %c0_i32_1 = arith.constant 0 : i32
    return %c0_i32, %c0_i32_0 : i32, i32
  }
  func.func @transform_5(%arg0: i32, %arg1: i32) -> (i32, i32) {
    %c0_i32 = arith.constant 0 : i32
    %c0_i32_0 = arith.constant 0 : i32
    %c0_i32_1 = arith.constant 0 : i32
    return %c0_i32, %c0_i32_0 : i32, i32
  }
  func.func @transform_6(%arg0: i32, %arg1: i32) -> (i32, i32) {
    %c0_i32 = arith.constant 0 : i32
    %c0_i32_0 = arith.constant 0 : i32
    return %arg0, %c0_i32 : i32, i32
  }
}

</mosaic_0001>

<llo_original>
// kernel: tpu_custom_call.1
$region0: #{tpu_custom_call.1}
  #allocation0 [shape = 'u32[]', space=smem, size = 0x4, offset = 0x4, fixed_abs, tag = 'smem constant byte address 0x4 - core index']
  #allocation1 [shape = 'u32[72,128]{1,0:T(1,128)}', space=vmem, size = 0x9000, scoped, tag = 'internal scratch']
  #allocation2 [shape = 'f32[128,128]{1,0:T(8,128)}', space=vmem, size = 0x10000, scoped, tag = 'scratch operand']
  %s0 = inlined_call_operand.vmem [shape: bf16[128,128], index: 0, kind: input, shape index: {}]
  %s1 = inlined_call_operand.vmem [shape: bf16[128,128], index: 1, kind: input, shape index: {}]
  %s2 = inlined_call_operand.vmem [shape: f32[128,1], index: 2, kind: input, shape index: {}]
  %s3 = inlined_call_operand.hbm [shape: bf16[128,128], index: 3, kind: input, shape index: {}]
  %s4 = inlined_call_operand.hbm [shape: bf16[128,128], index: 4, kind: input, shape index: {}]
  %s5 = inlined_call_operand.vmem [shape: f32[1,128], index: 5, kind: input, shape index: {}]
  %s6 = inlined_call_operand.hbm [shape: bf16[128,128], index: 6, kind: output, shape index: {}]
  %s7 = sld [smem:[#allocation0]]
  $region50: #{tpu_custom_call.1} parent=0
    _
  %s9 = ssub.s32 1, %s7
  %s10 = scalar_select 0, %s9, %s7
  $region1: #{tpu_custom_call.1} parent=0
    #allocation3 [shape = 'u8[32768]{0}', space=vmem, size = 0x8000, scoped, tag = 'input window, operand 3, single buffered']
    #allocation4 [shape = 's32[1]{0}', space=sflag, size = 0x4, scoped, tag = 'scoped memory for tpu_custom_call.1']
    #allocation5 [shape = 's32[1]{0}', space=sflag, size = 0x4, scoped, tag = 'scoped memory for tpu_custom_call.1']
    #allocation6 [shape = 'u8[32768]{0}', space=vmem, size = 0x8000, scoped, tag = 'input window, operand 4, single buffered']
    #allocation7 [shape = 's32[1]{0}', space=sflag, size = 0x4, scoped, tag = 'scoped memory for tpu_custom_call.1']
    #allocation8 [shape = 'u8[32768]{0}', space=vmem, size = 0x8000, scoped, tag = 'output window, operand 0, single buffered']
    %11 = vsyncpa [#allocation4], 0
    %12 = vsyncpa [#allocation7], 0
    %13 = vsyncpa [#allocation5], 0
    // Predicated region
    $region2: #{tpu_custom_call.1} parent=1 // pred_check
      _
    $region3: #{tpu_custom_call.1} parent=1 // pred_check_branch
      %15 = sbr.rel (0) target = $region5
    $region4: #{tpu_custom_call.1} parent=1 // pred_region
      _
    $region5: #{tpu_custom_call.1} parent=1 // pred_fallthru
      _
    // Predicated region
    $region6: #{tpu_custom_call.1} parent=1 // pred_check
      _
    $region7: #{tpu_custom_call.1} parent=1 // pred_check_branch
      %17 = sbr.rel (0) target = $region9
    $region8: #{tpu_custom_call.1} parent=1 // pred_region
      _
    $region9: #{tpu_custom_call.1} parent=1 // pred_fallthru
      _
    // Predicated region
    $region10: #{tpu_custom_call.1} parent=1 // pred_check
      _
    $region11: #{tpu_custom_call.1} parent=1 // pred_check_branch
      %19 = sbr.rel (0) target = $region13
    $region12: #{tpu_custom_call.1} parent=1 // pred_region
      _
    $region13: #{tpu_custom_call.1} parent=1 // pred_fallthru
      _
    // Predicated region
    $region14: #{tpu_custom_call.1} parent=1 // pred_check
      _
    $region15: #{tpu_custom_call.1} parent=1 // pred_check_branch
      %21 = sbr.rel (0) target = $region17
    $region16: #{tpu_custom_call.1} parent=1 // pred_region
      %23 = vsyncadd [#allocation4], 0
      %s24 = sshll.u32 %s3, 4
      %s25 = int_to_ptr.hbm [resolvable:$true] %s24
      %s26 = sshll.u32 [#allocation3], 4
      %s27 = int_to_ptr.vmem [resolvable:$true] %s26
      %32 = dma.hbm_to_vmem [thread:$0]  %s25, 1024, %s27, [#allocation4], 64, 64, 4
    $region17: #{tpu_custom_call.1} parent=1 // pred_fallthru
      _
    // Predicated region
    $region18: #{tpu_custom_call.1} parent=1 // pred_check
      _
    $region19: #{tpu_custom_call.1} parent=1 // pred_check_branch
      %34 = sbr.rel (0) target = $region21
    $region20: #{tpu_custom_call.1} parent=1 // pred_region
      %36 = vsyncadd [#allocation7], 0
      %s37 = sshll.u32 %s4, 4
      %s38 = int_to_ptr.hbm [resolvable:$true] %s37
      %s39 = sshll.u32 [#allocation6], 4
      %s40 = int_to_ptr.vmem [resolvable:$true] %s39
      %45 = dma.hbm_to_vmem [thread:$0]  %s38, 1024, %s40, [#allocation7], 64, 64, 4
    $region21: #{tpu_custom_call.1} parent=1 // pred_fallthru
      _
    // Predicated region
    $region22: #{tpu_custom_call.1} parent=1 // pred_check
      _
    $region23: #{tpu_custom_call.1} parent=1 // pred_check_branch
      %47 = sbr.rel (0) target = $region25
    $region24: #{tpu_custom_call.1} parent=1 // pred_region
      _
    $region25: #{tpu_custom_call.1} parent=1 // pred_fallthru
      _
    // Predicated region
    $region26: #{tpu_custom_call.1} parent=1 // pred_check
      _
    $region27: #{tpu_custom_call.1} parent=1 // pred_check_branch
      %49 = sbr.rel (0) target = $region29
    $region28: #{tpu_custom_call.1} parent=1 // pred_region
      %51 = dma.done [#allocation4], 1024
    $region29: #{tpu_custom_call.1} parent=1 // pred_fallthru
      _
    // Predicated region
    $region30: #{tpu_custom_call.1} parent=1 // pred_check
      _
    $region31: #{tpu_custom_call.1} parent=1 // pred_check_branch
      %53 = sbr.rel (0) target = $region33
    $region32: #{tpu_custom_call.1} parent=1 // pred_region
      %55 = dma.done [#allocation7], 1024
    $region33: #{tpu_custom_call.1} parent=1 // pred_fallthru
      _
    %p56 = scmp.eq.s32.totalorder 0, 0
    // Predicated region
    $region34: #{tpu_custom_call.1} parent=1 // pred_check
      %p57 = pneg %p56
    $region35: #{tpu_custom_call.1} parent=1 // pred_check_branch
      %59 = sbr.rel (%p57) target = $region37
    $region36: #{tpu_custom_call.1} parent=1 // pred_region
      %60 = vst [vmem:[#allocation2] sm:$0xff] 0.0
      %61 = vst [vmem:[#allocation2 + $0x8] sm:$0xff] 0.0
      %62 = vst [vmem:[#allocation2 + $0x10] sm:$0xff] 0.0
      %63 = vst [vmem:[#allocation2 + $0x18] sm:$0xff] 0.0
      %64 = vst [vmem:[#allocation2 + $0x20] sm:$0xff] 0.0
      %65 = vst [vmem:[#allocation2 + $0x28] sm:$0xff] 0.0
      %66 = vst [vmem:[#allocation2 + $0x30] sm:$0xff] 0.0
      %67 = vst [vmem:[#allocation2 + $0x38] sm:$0xff] 0.0
      %68 = vst [vmem:[#allocation2 + $0x40] sm:$0xff] 0.0
      %69 = vst [vmem:[#allocation2 + $0x48] sm:$0xff] 0.0
      %70 = vst [vmem:[#allocation2 + $0x50] sm:$0xff] 0.0
      %71 = vst [vmem:[#allocation2 + $0x58] sm:$0xff] 0.0
      %72 = vst [vmem:[#allocation2 + $0x60] sm:$0xff] 0.0
      %73 = vst [vmem:[#allocation2 + $0x68] sm:$0xff] 0.0
      %74 = vst [vmem:[#allocation2 + $0x70] sm:$0xff] 0.0
      %75 = vst [vmem:[#allocation2 + $0x78] sm:$0xff] 0.0
    $region37: #{tpu_custom_call.1} parent=1 // pred_fallthru
      _
    %s76 = smul.u32 0, 128
    %s77 = sshra.s32 %s76, 3
    %s78 = sand.u32 %s76, 7
    %s79 = smul.addr %s77, 4
    %s80 = scalar_lea.vmem %s1, %s79
    %v81 = vld [vmem:[%s80] sm:$0xf]
    %v82 = vld [vmem:[%s80 + $0x4] sm:$0xf]
    %v83 = vld [vmem:[%s80 + $0x8] sm:$0xf]
    %v84 = vld [vmem:[%s80 + $0xc] sm:$0xf]
    %v85 = vld [vmem:[%s80 + $0x10] sm:$0xf]
    %v86 = vld [vmem:[%s80 + $0x14] sm:$0xf]
    %v87 = vld [vmem:[%s80 + $0x18] sm:$0xf]
    %v88 = vld [vmem:[%s80 + $0x1c] sm:$0xf]
    %v89 = vld [vmem:[%s80 + $0x20] sm:$0xf]
    %v90 = vld [vmem:[%s80 + $0x24] sm:$0xf]
    %v91 = vld [vmem:[%s80 + $0x28] sm:$0xf]
    %v92 = vld [vmem:[%s80 + $0x2c] sm:$0xf]
    %v93 = vld [vmem:[%s80 + $0x30] sm:$0xf]
    %v94 = vld [vmem:[%s80 + $0x34] sm:$0xf]
    %v95 = vld [vmem:[%s80 + $0x38] sm:$0xf]
    %v96 = vld [vmem:[%s80 + $0x3c] sm:$0xf]
    %v97 = vld [vmem:[#allocation2] sm:$0xff]
    %v98 = vld [vmem:[#allocation2 + $0x8] sm:$0xff]
    %v99 = vld [vmem:[#allocation2 + $0x10] sm:$0xff]
    %v100 = vld [vmem:[#allocation2 + $0x18] sm:$0xff]
    %v101 = vld [vmem:[#allocation2 + $0x20] sm:$0xff]
    %v102 = vld [vmem:[#allocation2 + $0x28] sm:$0xff]
    %v103 = vld [vmem:[#allocation2 + $0x30] sm:$0xff]
    %v104 = vld [vmem:[#allocation2 + $0x38] sm:$0xff]
    %v105 = vld [vmem:[#allocation2 + $0x40] sm:$0xff]
    %v106 = vld [vmem:[#allocation2 + $0x48] sm:$0xff]
    %v107 = vld [vmem:[#allocation2 + $0x50] sm:$0xff]
    %v108 = vld [vmem:[#allocation2 + $0x58] sm:$0xff]
    %v109 = vld [vmem:[#allocation2 + $0x60] sm:$0xff]
    %v110 = vld [vmem:[#allocation2 + $0x68] sm:$0xff]
    %v111 = vld [vmem:[#allocation2 + $0x70] sm:$0xff]
    %v112 = vld [vmem:[#allocation2 + $0x78] sm:$0xff]
    %v113 = vld [vmem:[%s0] sm:$0xf]
    %v114 = vld [vmem:[%s0 + $0x4] sm:$0xf]
    %v115 = vld [vmem:[%s0 + $0x8] sm:$0xf]
    %v116 = vld [vmem:[%s0 + $0xc] sm:$0xf]
    %v117 = vld [vmem:[%s0 + $0x10] sm:$0xf]
    %v118 = vld [vmem:[%s0 + $0x14] sm:$0xf]
    %v119 = vld [vmem:[%s0 + $0x18] sm:$0xf]
    %v120 = vld [vmem:[%s0 + $0x1c] sm:$0xf]
    %v121 = vld [vmem:[%s0 + $0x20] sm:$0xf]
    %v122 = vld [vmem:[%s0 + $0x24] sm:$0xf]
    %v123 = vld [vmem:[%s0 + $0x28] sm:$0xf]
    %v124 = vld [vmem:[%s0 + $0x2c] sm:$0xf]
    %v125 = vld [vmem:[%s0 + $0x30] sm:$0xf]
    %v126 = vld [vmem:[%s0 + $0x34] sm:$0xf]
    %v127 = vld [vmem:[%s0 + $0x38] sm:$0xf]
    %v128 = vld [vmem:[%s0 + $0x3c] sm:$0xf]
    %v145 = vunpack.c.l.b16 %v113
    %v146 = vunpack.c.l.b16 %v114
    %v147 = vunpack.c.l.b16 %v115
    %v148 = vunpack.c.l.b16 %v116
    %v149 = vunpack.c.l.b16 %v117
    %v150 = vunpack.c.l.b16 %v118
    %v151 = vunpack.c.l.b16 %v119
    %v152 = vunpack.c.l.b16 %v120
    %v153 = vunpack.c.l.b16 %v121
    %v154 = vunpack.c.l.b16 %v122
    %v155 = vunpack.c.l.b16 %v123
    %v156 = vunpack.c.l.b16 %v124
    %v157 = vunpack.c.l.b16 %v125
    %v158 = vunpack.c.l.b16 %v126
    %v159 = vunpack.c.l.b16 %v127
    %v160 = vunpack.c.l.b16 %v128
    %v161 = vpack.c.b16 %v146, %v145
    %v162 = vpack.c.b16 %v148, %v147
    %v163 = vpack.c.b16 %v150, %v149
    %v164 = vpack.c.b16 %v152, %v151
    %v165 = vpack.c.b16 %v154, %v153
    %v166 = vpack.c.b16 %v156, %v155
    %v167 = vpack.c.b16 %v158, %v157
    %v168 = vpack.c.b16 %v160, %v159
    %v193 = vunpack.c.l.b16 %v81
    %v194 = vunpack.c.l.b16 %v82
    %v195 = vunpack.c.l.b16 %v83
    %v196 = vunpack.c.l.b16 %v84
    %v197 = vunpack.c.l.b16 %v85
    %v198 = vunpack.c.l.b16 %v86
    %v199 = vunpack.c.l.b16 %v87
    %v200 = vunpack.c.l.b16 %v88
    %v201 = vunpack.c.l.b16 %v89
    %v202 = vunpack.c.l.b16 %v90
    %v203 = vunpack.c.l.b16 %v91
    %v204 = vunpack.c.l.b16 %v92
    %v205 = vunpack.c.l.b16 %v93
    %v206 = vunpack.c.l.b16 %v94
    %v207 = vunpack.c.l.b16 %v95
    %v208 = vunpack.c.l.b16 %v96
    %v209 = vpack.c.b16 %v194, %v193
    %v210 = vpack.c.b16 %v196, %v195
    %v211 = vpack.c.b16 %v198, %v197
    %v212 = vpack.c.b16 %v200, %v199
    %v213 = vpack.c.b16 %v202, %v201
    %v214 = vpack.c.b16 %v204, %v203
    %v215 = vpack.c.b16 %v206, %v205
    %v216 = vpack.c.b16 %v208, %v207
    %225 = vmatpush.bf16.msra.mxu0 %v216
    %226 = vmatpush.bf16.msra.mxu0 %v215
    %227 = vmatpush.bf16.msra.mxu0 %v214
    %228 = vmatpush.bf16.msra.mxu0 %v213
    %229 = vmatpush.bf16.msra.mxu0 %v212
    %230 = vmatpush.bf16.msra.mxu0 %v211
    %231 = vmatpush.bf16.msra.mxu0 %v210
    %232 = vmatpush.bf16.msra.mxu0 %v209
    %233 = vmatmul.bf16.gmra.mxu0 %v161
    %v234 = vpop.f32.mrf.mxu0
    %v235 = vadd.f32 0.0, %v234
    %v236 = vpop.f32.mrf.mxu0
    %v237 = vadd.f32 0.0, %v236
    %238 = vmatmul.bf16.gmra.mxu0 %v162
    %v239 = vpop.f32.mrf.mxu0
    %v240 = vadd.f32 0.0, %v239
    %v241 = vpop.f32.mrf.mxu0
    %v242 = vadd.f32 0.0, %v241
    %243 = vmatmul.bf16.gmra.mxu0 %v163
    %v244 = vpop.f32.mrf.mxu0
    %v245 = vadd.f32 0.0, %v244
    %v246 = vpop.f32.mrf.mxu0
    %v247 = vadd.f32 0.0, %v246
    %248 = vmatmul.bf16.gmra.mxu0 %v164
    %v249 = vpop.f32.mrf.mxu0
    %v250 = vadd.f32 0.0, %v249
    %v251 = vpop.f32.mrf.mxu0
    %v252 = vadd.f32 0.0, %v251
    %253 = vmatmul.bf16.gmra.mxu0 %v165
    %v254 = vpop.f32.mrf.mxu0
    %v255 = vadd.f32 0.0, %v254
    %v256 = vpop.f32.mrf.mxu0
    %v257 = vadd.f32 0.0, %v256
    %258 = vmatmul.bf16.gmra.mxu0 %v166
    %v259 = vpop.f32.mrf.mxu0
    %v260 = vadd.f32 0.0, %v259
    %v261 = vpop.f32.mrf.mxu0
    %v262 = vadd.f32 0.0, %v261
    %263 = vmatmul.bf16.gmra.mxu0 %v167
    %v264 = vpop.f32.mrf.mxu0
    %v265 = vadd.f32 0.0, %v264
    %v266 = vpop.f32.mrf.mxu0
    %v267 = vadd.f32 0.0, %v266
    %268 = vmatmul.bf16.gmra.mxu0 %v168
    %v269 = vpop.f32.mrf.mxu0
    %v270 = vadd.f32 0.0, %v269
    %v271 = vpop.f32.mrf.mxu0
    %v272 = vadd.f32 0.0, %v271
    %273 = vdwg.mxu0
    %v274 = vadd.f32 %v97, %v235
    %v275 = vadd.f32 %v98, %v237
    %v276 = vadd.f32 %v99, %v240
    %v277 = vadd.f32 %v100, %v242
    %v278 = vadd.f32 %v101, %v245
    %v279 = vadd.f32 %v102, %v247
    %v280 = vadd.f32 %v103, %v250
    %v281 = vadd.f32 %v104, %v252
    %v282 = vadd.f32 %v105, %v255
    %v283 = vadd.f32 %v106, %v257
    %v284 = vadd.f32 %v107, %v260
    %v285 = vadd.f32 %v108, %v262
    %v286 = vadd.f32 %v109, %v265
    %v287 = vadd.f32 %v110, %v267
    %v288 = vadd.f32 %v111, %v270
    %v289 = vadd.f32 %v112, %v272
    %290 = vst [vmem:[#allocation2] sm:$0xff] %v274
    %291 = vst [vmem:[#allocation2 + $0x8] sm:$0xff] %v275
    %292 = vst [vmem:[#allocation2 + $0x10] sm:$0xff] %v276
    %293 = vst [vmem:[#allocation2 + $0x18] sm:$0xff] %v277
    %294 = vst [vmem:[#allocation2 + $0x20] sm:$0xff] %v278
    %295 = vst [vmem:[#allocation2 + $0x28] sm:$0xff] %v279
    %296 = vst [vmem:[#allocation2 + $0x30] sm:$0xff] %v280
    %297 = vst [vmem:[#allocation2 + $0x38] sm:$0xff] %v281
    %298 = vst [vmem:[#allocation2 + $0x40] sm:$0xff] %v282
    %299 = vst [vmem:[#allocation2 + $0x48] sm:$0xff] %v283
    %300 = vst [vmem:[#allocation2 + $0x50] sm:$0xff] %v284
    %301 = vst [vmem:[#allocation2 + $0x58] sm:$0xff] %v285
    %302 = vst [vmem:[#allocation2 + $0x60] sm:$0xff] %v286
    %303 = vst [vmem:[#allocation2 + $0x68] sm:$0xff] %v287
    %304 = vst [vmem:[#allocation2 + $0x70] sm:$0xff] %v288
    %305 = vst [vmem:[#allocation2 + $0x78] sm:$0xff] %v289
    // Predicated region
    $region38: #{tpu_custom_call.1} parent=1 // pred_check
      %p306 = pneg %p56
    $region39: #{tpu_custom_call.1} parent=1 // pred_check_branch
      %308 = sbr.rel (%p306) target = $region41
    $region40: #{tpu_custom_call.1} parent=1 // pred_region
      %v309 = vld [vmem:[#allocation2] sm:$0xff]
      %v310 = vld [vmem:[#allocation2 + $0x8] sm:$0xff]
      %v311 = vld [vmem:[#allocation2 + $0x10] sm:$0xff]
      %v312 = vld [vmem:[#allocation2 + $0x18] sm:$0xff]
      %v313 = vld [vmem:[#allocation2 + $0x20] sm:$0xff]
      %v314 = vld [vmem:[#allocation2 + $0x28] sm:$0xff]
      %v315 = vld [vmem:[#allocation2 + $0x30] sm:$0xff]
      %v316 = vld [vmem:[#allocation2 + $0x38] sm:$0xff]
      %v317 = vld [vmem:[#allocation2 + $0x40] sm:$0xff]
      %v318 = vld [vmem:[#allocation2 + $0x48] sm:$0xff]
      %v319 = vld [vmem:[#allocation2 + $0x50] sm:$0xff]
      %v320 = vld [vmem:[#allocation2 + $0x58] sm:$0xff]
      %v321 = vld [vmem:[#allocation2 + $0x60] sm:$0xff]
      %v322 = vld [vmem:[#allocation2 + $0x68] sm:$0xff]
      %v323 = vld [vmem:[#allocation2 + $0x70] sm:$0xff]
      %v324 = vld [vmem:[#allocation2 + $0x78] sm:$0xff]
      %v325 = vld [vmem:[%s2] sm:$0xff]
      %v326 = vld [vmem:[%s2 + $0x8] sm:$0xff]
      %v327 = vld [vmem:[%s2 + $0x10] sm:$0xff]
      %v328 = vld [vmem:[%s2 + $0x18] sm:$0xff]
      %v329 = vld [vmem:[%s2 + $0x20] sm:$0xff]
      %v330 = vld [vmem:[%s2 + $0x28] sm:$0xff]
      %v331 = vld [vmem:[%s2 + $0x30] sm:$0xff]
      %v332 = vld [vmem:[%s2 + $0x38] sm:$0xff]
      %v333 = vld [vmem:[%s2 + $0x40] sm:$0xff]
      %v334 = vld [vmem:[%s2 + $0x48] sm:$0xff]
      %v335 = vld [vmem:[%s2 + $0x50] sm:$0xff]
      %v336 = vld [vmem:[%s2 + $0x58] sm:$0xff]
      %v337 = vld [vmem:[%s2 + $0x60] sm:$0xff]
      %v338 = vld [vmem:[%s2 + $0x68] sm:$0xff]
      %v339 = vld [vmem:[%s2 + $0x70] sm:$0xff]
      %v340 = vld [vmem:[%s2 + $0x78] sm:$0xff]
      %342 = vset.pattern.permute.xlu0 0
      %343 = vperm.xlu0 %342, %v325
      %v344 = vpop.permute.xlu0 %343
      %347 = vset.pattern.permute.xlu0 0
      %348 = vperm.xlu0 %347, %v326
      %v349 = vpop.permute.xlu0 %348
      %352 = vset.pattern.permute.xlu0 0
      %353 = vperm.xlu0 %352, %v327
      %v354 = vpop.permute.xlu0 %353
      %357 = vset.pattern.permute.xlu0 0
      %358 = vperm.xlu0 %357, %v328
      %v359 = vpop.permute.xlu0 %358
      %362 = vset.pattern.permute.xlu0 0
      %363 = vperm.xlu0 %362, %v329
      %v364 = vpop.permute.xlu0 %363
      %367 = vset.pattern.permute.xlu0 0
      %368 = vperm.xlu0 %367, %v330
      %v369 = vpop.permute.xlu0 %368
      %372 = vset.pattern.permute.xlu0 0
      %373 = vperm.xlu0 %372, %v331
      %v374 = vpop.permute.xlu0 %373
      %377 = vset.pattern.permute.xlu0 0
      %378 = vperm.xlu0 %377, %v332
      %v379 = vpop.permute.xlu0 %378
      %382 = vset.pattern.permute.xlu0 0
      %383 = vperm.xlu0 %382, %v333
      %v384 = vpop.permute.xlu0 %383
      %387 = vset.pattern.permute.xlu0 0
      %388 = vperm.xlu0 %387, %v334
      %v389 = vpop.permute.xlu0 %388
      %392 = vset.pattern.permute.xlu0 0
      %393 = vperm.xlu0 %392, %v335
      %v394 = vpop.permute.xlu0 %393
      %397 = vset.pattern.permute.xlu0 0
      %398 = vperm.xlu0 %397, %v336
      %v399 = vpop.permute.xlu0 %398
      %402 = vset.pattern.permute.xlu0 0
      %403 = vperm.xlu0 %402, %v337
      %v404 = vpop.permute.xlu0 %403
      %407 = vset.pattern.permute.xlu0 0
      %408 = vperm.xlu0 %407, %v338
      %v409 = vpop.permute.xlu0 %408
      %412 = vset.pattern.permute.xlu0 0
      %413 = vperm.xlu0 %412, %v339
      %v414 = vpop.permute.xlu0 %413
      %417 = vset.pattern.permute.xlu0 0
      %418 = vperm.xlu0 %417, %v340
      %v419 = vpop.permute.xlu0 %418
      %v421 = vmul.f32 %v309, %v344
      %v422 = vmul.f32 %v310, %v349
      %v423 = vmul.f32 %v311, %v354
      %v424 = vmul.f32 %v312, %v359
      %v425 = vmul.f32 %v313, %v364
      %v426 = vmul.f32 %v314, %v369
      %v427 = vmul.f32 %v315, %v374
      %v428 = vmul.f32 %v316, %v379
      %v429 = vmul.f32 %v317, %v384
      %v430 = vmul.f32 %v318, %v389
      %v431 = vmul.f32 %v319, %v394
      %v432 = vmul.f32 %v320, %v399
      %v433 = vmul.f32 %v321, %v404
      %v434 = vmul.f32 %v322, %v409
      %v435 = vmul.f32 %v323, %v414
      %v436 = vmul.f32 %v324, %v419
      %v437 = vpack.c.bf16 %v422, %v421
      %v438 = vpack.c.bf16 %v424, %v423
      %v439 = vpack.c.bf16 %v426, %v425
      %v440 = vpack.c.bf16 %v428, %v427
      %v441 = vpack.c.bf16 %v430, %v429
      %v442 = vpack.c.bf16 %v432, %v431
      %v443 = vpack.c.bf16 %v434, %v433
      %v444 = vpack.c.bf16 %v436, %v435
      %s445 = smul.u32 0, 128
      %s446 = sshra.s32 %s445, 3
      %s447 = sand.u32 %s445, 7
      %s448 = smul.addr %s446, 4
      %s449 = scalar_lea.vmem %s1, %s448
      %v450 = vld [vmem:[%s449] sm:$0xf]
      %v451 = vld [vmem:[%s449 + $0x4] sm:$0xf]
      %v452 = vld [vmem:[%s449 + $0x8] sm:$0xf]
      %v453 = vld [vmem:[%s449 + $0xc] sm:$0xf]
      %v454 = vld [vmem:[%s449 + $0x10] sm:$0xf]
      %v455 = vld [vmem:[%s449 + $0x14] sm:$0xf]
      %v456 = vld [vmem:[%s449 + $0x18] sm:$0xf]
      %v457 = vld [vmem:[%s449 + $0x1c] sm:$0xf]
      %v458 = vld [vmem:[%s449 + $0x20] sm:$0xf]
      %v459 = vld [vmem:[%s449 + $0x24] sm:$0xf]
      %v460 = vld [vmem:[%s449 + $0x28] sm:$0xf]
      %v461 = vld [vmem:[%s449 + $0x2c] sm:$0xf]
      %v462 = vld [vmem:[%s449 + $0x30] sm:$0xf]
      %v463 = vld [vmem:[%s449 + $0x34] sm:$0xf]
      %v464 = vld [vmem:[%s449 + $0x38] sm:$0xf]
      %v465 = vld [vmem:[%s449 + $0x3c] sm:$0xf]
      %v466 = vld [vmem:[#allocation3] sm:$0xf]
      %v467 = vld [vmem:[#allocation3 + $0x4] sm:$0xf]
      %v468 = vld [vmem:[#allocation3 + $0x8] sm:$0xf]
      %v469 = vld [vmem:[#allocation3 + $0xc] sm:$0xf]
      %v470 = vld [vmem:[#allocation3 + $0x10] sm:$0xf]
      %v471 = vld [vmem:[#allocation3 + $0x14] sm:$0xf]
      %v472 = vld [vmem:[#allocation3 + $0x18] sm:$0xf]
      %v473 = vld [vmem:[#allocation3 + $0x1c] sm:$0xf]
      %v474 = vld [vmem:[#allocation3 + $0x20] sm:$0xf]
      %v475 = vld [vmem:[#allocation3 + $0x24] sm:$0xf]
      %v476 = vld [vmem:[#allocation3 + $0x28] sm:$0xf]
      %v477 = vld [vmem:[#allocation3 + $0x2c] sm:$0xf]
      %v478 = vld [vmem:[#allocation3 + $0x30] sm:$0xf]
      %v479 = vld [vmem:[#allocation3 + $0x34] sm:$0xf]
      %v480 = vld [vmem:[#allocation3 + $0x38] sm:$0xf]
      %v481 = vld [vmem:[#allocation3 + $0x3c] sm:$0xf]
      %v482 = vld [vmem:[#allocation6] sm:$0xf]
      %v483 = vld [vmem:[#allocation6 + $0x4] sm:$0xf]
      %v484 = vld [vmem:[#allocation6 + $0x8] sm:$0xf]
      %v485 = vld [vmem:[#allocation6 + $0xc] sm:$0xf]
      %v486 = vld [vmem:[#allocation6 + $0x10] sm:$0xf]
      %v487 = vld [vmem:[#allocation6 + $0x14] sm:$0xf]
      %v488 = vld [vmem:[#allocation6 + $0x18] sm:$0xf]
      %v489 = vld [vmem:[#allocation6 + $0x1c] sm:$0xf]
      %v490 = vld [vmem:[#allocation6 + $0x20] sm:$0xf]
      %v491 = vld [vmem:[#allocation6 + $0x24] sm:$0xf]
      %v492 = vld [vmem:[#allocation6 + $0x28] sm:$0xf]
      %v493 = vld [vmem:[#allocation6 + $0x2c] sm:$0xf]
      %v494 = vld [vmem:[#allocation6 + $0x30] sm:$0xf]
      %v495 = vld [vmem:[#allocation6 + $0x34] sm:$0xf]
      %v496 = vld [vmem:[#allocation6 + $0x38] sm:$0xf]
      %v497 = vld [vmem:[#allocation6 + $0x3c] sm:$0xf]
      %v514 = vunpack.c.l.b16 %v450
      %v515 = vunpack.c.l.b16 %v451
      %v516 = vunpack.c.l.b16 %v452
      %v517 = vunpack.c.l.b16 %v453
      %v518 = vunpack.c.l.b16 %v454
      %v519 = vunpack.c.l.b16 %v455
      %v520 = vunpack.c.l.b16 %v456
      %v521 = vunpack.c.l.b16 %v457
      %v522 = vunpack.c.l.b16 %v458
      %v523 = vunpack.c.l.b16 %v459
      %v524 = vunpack.c.l.b16 %v460
      %v525 = vunpack.c.l.b16 %v461
      %v526 = vunpack.c.l.b16 %v462
      %v527 = vunpack.c.l.b16 %v463
      %v528 = vunpack.c.l.b16 %v464
      %v529 = vunpack.c.l.b16 %v465
      %v530 = vpack.c.b16 %v515, %v514
      %v531 = vpack.c.b16 %v517, %v516
      %v532 = vpack.c.b16 %v519, %v518
      %v533 = vpack.c.b16 %v521, %v520
      %v534 = vpack.c.b16 %v523, %v522
      %v535 = vpack.c.b16 %v525, %v524
      %v536 = vpack.c.b16 %v527, %v526
      %v537 = vpack.c.b16 %v529, %v528
      %v562 = vunpack.c.l.b16 %v482
      %v563 = vunpack.c.l.b16 %v483
      %v564 = vunpack.c.l.b16 %v484
      %v565 = vunpack.c.l.b16 %v485
      %v566 = vunpack.c.l.b16 %v486
      %v567 = vunpack.c.l.b16 %v487
      %v568 = vunpack.c.l.b16 %v488
      %v569 = vunpack.c.l.b16 %v489
      %v570 = vunpack.c.l.b16 %v490
      %v571 = vunpack.c.l.b16 %v491
      %v572 = vunpack.c.l.b16 %v492
      %v573 = vunpack.c.l.b16 %v493
      %v574 = vunpack.c.l.b16 %v494
      %v575 = vunpack.c.l.b16 %v495
      %v576 = vunpack.c.l.b16 %v496
      %v577 = vunpack.c.l.b16 %v497
      %v578 = vpack.c.b16 %v563, %v562
      %v579 = vpack.c.b16 %v565, %v564
      %v580 = vpack.c.b16 %v567, %v566
      %v581 = vpack.c.b16 %v569, %v568
      %v582 = vpack.c.b16 %v571, %v570
      %v583 = vpack.c.b16 %v573, %v572
      %v584 = vpack.c.b16 %v575, %v574
      %v585 = vpack.c.b16 %v577, %v576
      %594 = vmatpush.bf16.msra.mxu0 %v585
      %595 = vmatpush.bf16.msra.mxu0 %v584
      %596 = vmatpush.bf16.msra.mxu0 %v583
      %597 = vmatpush.bf16.msra.mxu0 %v582
      %598 = vmatpush.bf16.msra.mxu0 %v581
      %599 = vmatpush.bf16.msra.mxu0 %v580
      %600 = vmatpush.bf16.msra.mxu0 %v579
      %601 = vmatpush.bf16.msra.mxu0 %v578
      %602 = vmatmul.bf16.gmra.mxu0 %v530
      %v603 = vpop.f32.mrf.mxu0
      %v604 = vadd.f32 0.0, %v603
      %v605 = vpop.f32.mrf.mxu0
      %v606 = vadd.f32 0.0, %v605
      %607 = vmatmul.bf16.gmra.mxu0 %v531
      %v608 = vpop.f32.mrf.mxu0
      %v609 = vadd.f32 0.0, %v608
      %v610 = vpop.f32.mrf.mxu0
      %v611 = vadd.f32 0.0, %v610
      %612 = vmatmul.bf16.gmra.mxu0 %v532
      %v613 = vpop.f32.mrf.mxu0
      %v614 = vadd.f32 0.0, %v613
      %v615 = vpop.f32.mrf.mxu0
      %v616 = vadd.f32 0.0, %v615
      %617 = vmatmul.bf16.gmra.mxu0 %v533
      %v618 = vpop.f32.mrf.mxu0
      %v619 = vadd.f32 0.0, %v618
      %v620 = vpop.f32.mrf.mxu0
      %v621 = vadd.f32 0.0, %v620
      %622 = vmatmul.bf16.gmra.mxu0 %v534
      %v623 = vpop.f32.mrf.mxu0
      %v624 = vadd.f32 0.0, %v623
      %v625 = vpop.f32.mrf.mxu0
      %v626 = vadd.f32 0.0, %v625
      %627 = vmatmul.bf16.gmra.mxu0 %v535
      %v628 = vpop.f32.mrf.mxu0
      %v629 = vadd.f32 0.0, %v628
      %v630 = vpop.f32.mrf.mxu0
      %v631 = vadd.f32 0.0, %v630
      %632 = vmatmul.bf16.gmra.mxu0 %v536
      %v633 = vpop.f32.mrf.mxu0
      %v634 = vadd.f32 0.0, %v633
      %v635 = vpop.f32.mrf.mxu0
      %v636 = vadd.f32 0.0, %v635
      %637 = vmatmul.bf16.gmra.mxu0 %v537
      %v638 = vpop.f32.mrf.mxu0
      %v639 = vadd.f32 0.0, %v638
      %v640 = vpop.f32.mrf.mxu0
      %v641 = vadd.f32 0.0, %v640
      %642 = vdwg.mxu0
      %v659 = vunpack.c.l.b16 %v466
      %v660 = vunpack.c.l.b16 %v467
      %v661 = vunpack.c.l.b16 %v468
      %v662 = vunpack.c.l.b16 %v469
      %v663 = vunpack.c.l.b16 %v470
      %v664 = vunpack.c.l.b16 %v471
      %v665 = vunpack.c.l.b16 %v472
      %v666 = vunpack.c.l.b16 %v473
      %v667 = vunpack.c.l.b16 %v474
      %v668 = vunpack.c.l.b16 %v475
      %v669 = vunpack.c.l.b16 %v476
      %v670 = vunpack.c.l.b16 %v477
      %v671 = vunpack.c.l.b16 %v478
      %v672 = vunpack.c.l.b16 %v479
      %v673 = vunpack.c.l.b16 %v480
      %v674 = vunpack.c.l.b16 %v481
      %v675 = vpack.c.b16 %v660, %v659
      %v676 = vpack.c.b16 %v662, %v661
      %v677 = vpack.c.b16 %v664, %v663
      %v678 = vpack.c.b16 %v666, %v665
      %v679 = vpack.c.b16 %v668, %v667
      %v680 = vpack.c.b16 %v670, %v669
      %v681 = vpack.c.b16 %v672, %v671
      %v682 = vpack.c.b16 %v674, %v673
      %691 = vmatpush.bf16.msra.mxu0 %v682
      %692 = vmatpush.bf16.msra.mxu0 %v681
      %693 = vmatpush.bf16.msra.mxu0 %v680
      %694 = vmatpush.bf16.msra.mxu0 %v679
      %695 = vmatpush.bf16.msra.mxu0 %v678
      %696 = vmatpush.bf16.msra.mxu0 %v677
      %697 = vmatpush.bf16.msra.mxu0 %v676
      %698 = vmatpush.bf16.msra.mxu0 %v675
      %699 = vmatmul.bf16.gmra.mxu0 %v437
      %v700 = vpop.f32.mrf.mxu0
      %v701 = vadd.f32 %v604, %v700
      %v702 = vpop.f32.mrf.mxu0
      %v703 = vadd.f32 %v606, %v702
      %704 = vmatmul.bf16.gmra.mxu0 %v438
      %v705 = vpop.f32.mrf.mxu0
      %v706 = vadd.f32 %v609, %v705
      %v707 = vpop.f32.mrf.mxu0
      %v708 = vadd.f32 %v611, %v707
      %709 = vmatmul.bf16.gmra.mxu0 %v439
      %v710 = vpop.f32.mrf.mxu0
      %v711 = vadd.f32 %v614, %v710
      %v712 = vpop.f32.mrf.mxu0
      %v713 = vadd.f32 %v616, %v712
      %714 = vmatmul.bf16.gmra.mxu0 %v440
      %v715 = vpop.f32.mrf.mxu0
      %v716 = vadd.f32 %v619, %v715
      %v717 = vpop.f32.mrf.mxu0
      %v718 = vadd.f32 %v621, %v717
      %719 = vmatmul.bf16.gmra.mxu0 %v441
      %v720 = vpop.f32.mrf.mxu0
      %v721 = vadd.f32 %v624, %v720
      %v722 = vpop.f32.mrf.mxu0
      %v723 = vadd.f32 %v626, %v722
      %724 = vmatmul.bf16.gmra.mxu0 %v442
      %v725 = vpop.f32.mrf.mxu0
      %v726 = vadd.f32 %v629, %v725
      %v727 = vpop.f32.mrf.mxu0
      %v728 = vadd.f32 %v631, %v727
      %729 = vmatmul.bf16.gmra.mxu0 %v443
      %v730 = vpop.f32.mrf.mxu0
      %v731 = vadd.f32 %v634, %v730
      %v732 = vpop.f32.mrf.mxu0
      %v733 = vadd.f32 %v636, %v732
      %734 = vmatmul.bf16.gmra.mxu0 %v444
      %v735 = vpop.f32.mrf.mxu0
      %v736 = vadd.f32 %v639, %v735
      %v737 = vpop.f32.mrf.mxu0
      %v738 = vadd.f32 %v641, %v737
      %739 = vdwg.mxu0
      %v740 = vld [vmem:[%s5] sm:$0x1]
      %v742 = vperm.slane %v740, 0
      %v744 = vadd.f32 %v701, %v742
      %v745 = vadd.f32 %v703, %v742
      %v746 = vadd.f32 %v706, %v742
      %v747 = vadd.f32 %v708, %v742
      %v748 = vadd.f32 %v711, %v742
      %v749 = vadd.f32 %v713, %v742
      %v750 = vadd.f32 %v716, %v742
      %v751 = vadd.f32 %v718, %v742
      %v752 = vadd.f32 %v721, %v742
      %v753 = vadd.f32 %v723, %v742
      %v754 = vadd.f32 %v726, %v742
      %v755 = vadd.f32 %v728, %v742
      %v756 = vadd.f32 %v731, %v742
      %v757 = vadd.f32 %v733, %v742
      %v758 = vadd.f32 %v736, %v742
      %v759 = vadd.f32 %v738, %v742
      %v760 = vmax.f32 %v744, 0.0
      %v761 = vmax.f32 %v745, 0.0
      %v762 = vmax.f32 %v746, 0.0
      %v763 = vmax.f32 %v747, 0.0
      %v764 = vmax.f32 %v748, 0.0
      %v765 = vmax.f32 %v749, 0.0
      %v766 = vmax.f32 %v750, 0.0
      %v767 = vmax.f32 %v751, 0.0
      %v768 = vmax.f32 %v752, 0.0
      %v769 = vmax.f32 %v753, 0.0
      %v770 = vmax.f32 %v754, 0.0
      %v771 = vmax.f32 %v755, 0.0
      %v772 = vmax.f32 %v756, 0.0
      %v773 = vmax.f32 %v757, 0.0
      %v774 = vmax.f32 %v758, 0.0
      %v775 = vmax.f32 %v759, 0.0
      %v776 = vpack.c.bf16 %v760, %v760
      %v777 = vpack.c.bf16 %v761, %v761
      %v778 = vpack.c.bf16 %v762, %v762
      %v779 = vpack.c.bf16 %v763, %v763
      %v780 = vpack.c.bf16 %v764, %v764
      %v781 = vpack.c.bf16 %v765, %v765
      %v782 = vpack.c.bf16 %v766, %v766
      %v783 = vpack.c.bf16 %v767, %v767
      %v784 = vpack.c.bf16 %v768, %v768
      %v785 = vpack.c.bf16 %v769, %v769
      %v786 = vpack.c.bf16 %v770, %v770
      %v787 = vpack.c.bf16 %v771, %v771
      %v788 = vpack.c.bf16 %v772, %v772
      %v789 = vpack.c.bf16 %v773, %v773
      %v790 = vpack.c.bf16 %v774, %v774
      %v791 = vpack.c.bf16 %v775, %v775
      %792 = vst [vmem:[#allocation8] sm:$0xf] %v776
      %793 = vst [vmem:[#allocation8 + $0x4] sm:$0xf] %v777
      %794 = vst [vmem:[#allocation8 + $0x8] sm:$0xf] %v778
      %795 = vst [vmem:[#allocation8 + $0xc] sm:$0xf] %v779
      %796 = vst [vmem:[#allocation8 + $0x10] sm:$0xf] %v780
      %797 = vst [vmem:[#allocation8 + $0x14] sm:$0xf] %v781
      %798 = vst [vmem:[#allocation8 + $0x18] sm:$0xf] %v782
      %799 = vst [vmem:[#allocation8 + $0x1c] sm:$0xf] %v783
      %800 = vst [vmem:[#allocation8 + $0x20] sm:$0xf] %v784
      %801 = vst [vmem:[#allocation8 + $0x24] sm:$0xf] %v785
      %802 = vst [vmem:[#allocation8 + $0x28] sm:$0xf] %v786
      %803 = vst [vmem:[#allocation8 + $0x2c] sm:$0xf] %v787
      %804 = vst [vmem:[#allocation8 + $0x30] sm:$0xf] %v788
      %805 = vst [vmem:[#allocation8 + $0x34] sm:$0xf] %v789
      %806 = vst [vmem:[#allocation8 + $0x38] sm:$0xf] %v790
      %807 = vst [vmem:[#allocation8 + $0x3c] sm:$0xf] %v791
    $region41: #{tpu_custom_call.1} parent=1 // pred_fallthru
      _
    // Predicated region
    $region42: #{tpu_custom_call.1} parent=1 // pred_check
      _
    $region43: #{tpu_custom_call.1} parent=1 // pred_check_branch
      %809 = sbr.rel (0) target = $region45
    $region44: #{tpu_custom_call.1} parent=1 // pred_region
      %811 = vsyncadd [#allocation5], 0
      %s812 = sshll.u32 [#allocation8], 4
      %s813 = int_to_ptr.vmem [resolvable:$true] %s812
      %s814 = sshll.u32 %s6, 4
      %s815 = int_to_ptr.hbm [resolvable:$true] %s814
      %820 = dma.vmem_to_hbm [thread:$0]  %s813, 1024, %s815, [#allocation5], 64, 64, 4
    $region45: #{tpu_custom_call.1} parent=1 // pred_fallthru
      _
    // Predicated region
    $region46: #{tpu_custom_call.1} parent=1 // pred_check
      _
    $region47: #{tpu_custom_call.1} parent=1 // pred_check_branch
      %822 = sbr.rel (0) target = $region49
    $region48: #{tpu_custom_call.1} parent=1 // pred_region
      %824 = dma.done [#allocation5], 1024
    $region49: #{tpu_custom_call.1} parent=1 // pred_fallthru
      _
    %825 = vsyncpa [#allocation4], 1
    %826 = vsyncpa [#allocation7], 1
    %827 = vsyncpa [#allocation5], 1

</llo_original>
